<compile_context>
chip_gen: v7x
topology: tpu7x:2x2x1
jax: 0.10.0
libtpu: 0.0.40
codegen_flags: <defaults>
</compile_context>

<pallas_src>
import functools

import jax
import jax.numpy as jnp
from jax.experimental import pallas as pl
from jax.experimental.pallas import tpu as pltpu

# Quantization scheme (synthetic stand-in for `quant_scheme`):
ACT_WL = 8     # activation word length (bits)
WEIGHT_WL = 8  # weight word length (bits)
_EPS = 1e-8


# ---------------------------------------------------------------------------
# TPU generation detection (drives int8-MXU use, tile targets, VMEM limits).
# ---------------------------------------------------------------------------
def _tpu_generation():
    try:
        kind = jax.devices()[0].device_kind.lower()
    except Exception:
        return 0
    for g in (7, 6, 5, 4, 3):
        if ("v%d" % g) in kind or kind.startswith("tpu%d" % g):
            return g
    return 0


_GEN = _tpu_generation()
# v5e/v6e have a native int8 MXU; v7x does not. Unknown/older gens use the
# safe bf16-upcast path.
_USE_INT8_MXU = _GEN in (5, 6)
if _GEN in (5, 6):
    _VMEM_LIMIT = 100 * 1024 * 1024      # 128 MiB physical VMEM per TC
    _VMEM_BUDGET = 72 * 1024 * 1024
elif _GEN == 7:
    _VMEM_LIMIT = 48 * 1024 * 1024       # 64 MiB physical: leave headroom
    _VMEM_BUDGET = 24 * 1024 * 1024
else:
    _VMEM_LIMIT = None                    # stay within default scoped budget
    _VMEM_BUDGET = 24 * 1024 * 1024


# ---------------------------------------------------------------------------
# Kernels: fused, tiled q/k/v projection over grid (p, i, j, k)
#   x      : [T, K]        int8  pre-quantized activations
#   w      : [3, K, D_out] int8  pre-quantized weights (transposed per proj)
#   scales : [3, 1, D_out] f32   combined a_scale * w_scale per output column
#   bias   : [3, 1, D_out] f32
#   out    : [3, T, D_out] f32
# ---------------------------------------------------------------------------
def _qkv_kernel_bf16(x_ref, w_ref, scale_ref, b_ref, o_ref):
    """int8 operands upcast to bf16 (exact, |v| <= 127); f32 accumulation
    directly in the k-resident output block (no scratch)."""
    k_step = pl.program_id(3)

    @pl.when(k_step == 0)
    def _init():
        o_ref[...] = jnp.zeros_like(o_ref)

    x = x_ref[...].astype(jnp.float32).astype(jnp.bfloat16)   # [tm, tk]
    w = w_ref[...].astype(jnp.float32).astype(jnp.bfloat16)   # [tk, tn]
    o_ref[...] += jnp.dot(x, w, preferred_element_type=jnp.float32)

    @pl.when(k_step == pl.num_programs(3) - 1)
    def _finalize():
        o_ref[...] = o_ref[...] * scale_ref[...] + b_ref[...]


def _qkv_kernel_int8(x_ref, w_ref, scale_ref, b_ref, o_ref, acc_ref):
    """Native int8 MXU path (v5e/v6e): exact int32 accumulation, dequantize
    once at finalize."""
    k_step = pl.program_id(3)

    @pl.when(k_step == 0)
    def _init():
        acc_ref[...] = jnp.zeros_like(acc_ref)

    acc_ref[...] += jnp.dot(x_ref[...], w_ref[...],
                            preferred_element_type=jnp.int32)

    @pl.when(k_step == pl.num_programs(3) - 1)
    def _finalize():
        o_ref[...] = (acc_ref[...].astype(jnp.float32) * scale_ref[...]
                      + b_ref[...])


# ---------------------------------------------------------------------------
# Tile selection.
# ---------------------------------------------------------------------------
def _pick_tile(dim, target, multiples):
    """Largest tile <= target that is a multiple of one of `multiples` and
    divides dim; falls back to the full dim (always a legal block)."""
    for m in multiples:
        if dim % m == 0:
            best = m
            t = m
            while t <= min(target, dim):
                if dim % t == 0:
                    best = t
                t += m
            return best
    return dim


def _choose_tiles(T, N, K):
    # v6e/v7x MXU is 2x256^2 -> prefer 256-multiples for lane/reduction dims.
    nk_mult = (256, 128) if _GEN >= 6 else (128,)
    tm = tn = tk = None
    for tk_t, tm_t, tn_t in ((K, 1024, 512), (1024, 512, 512),
                             (512, 512, 256), (256, 256, 256),
                             (256, 128, 128)):
        tm = _pick_tile(T, tm_t, (32, 8))
        tn = _pick_tile(N, tn_t, nk_mult)
        tk = _pick_tile(K, tk_t, nk_mult)
        fp = 2 * (tm * tk                  # int8 x block (double-buffered)
                  + tk * tn                # int8 w block
                  + tm * tn * 4            # f32 out block
                  + 2 * tn * 4)            # scales + bias
        fp += tm * tn * 4                  # int32 acc scratch (worst case)
        if fp <= _VMEM_BUDGET:
            return tm, tn, tk
    return tm, tn, tk


# ---------------------------------------------------------------------------
# pallas_call wrapper.
# ---------------------------------------------------------------------------
def _qkv_pallas(x_q, w_q, scales, bias):
    """x_q:[T,K] int8, w_q:[3,K,N] int8, scales/bias:[3,1,N] f32 -> [3,T,N] f32."""
    T, K = x_q.shape
    P, K2, N = w_q.shape
    assert K == K2 and P == 3
    assert scales.shape == (P, 1, N) and bias.shape == (P, 1, N)

    tm, tn, tk = _choose_tiles(T, N, K)
    grid = (P, T // tm, N // tn, K // tk)

    w_kwargs = {}
    if K // tk >= 4:
        # Deep reduction: triple-buffer the only operand whose block changes
        # every inner step to hide the weight-stream DMA.
        w_kwargs["pipeline_mode"] = pl.Buffered(3)

    in_specs = [
        pl.BlockSpec((tm, tk), lambda p, i, j, k: (i, k)),               # x_q
        pl.BlockSpec((None, tk, tn), lambda p, i, j, k: (p, k, j),
                     **w_kwargs),                                         # w_q
        pl.BlockSpec((None, 1, tn), lambda p, i, j, k: (p, 0, j)),        # scales
        pl.BlockSpec((None, 1, tn), lambda p, i, j, k: (p, 0, j)),        # bias
    ]
    out_spec = pl.BlockSpec((None, tm, tn), lambda p, i, j, k: (p, i, j))

    if _USE_INT8_MXU:
        kernel = _qkv_kernel_int8
        scratch = [pltpu.VMEM((tm, tn), jnp.int32)]
    else:
        kernel = _qkv_kernel_bf16
        scratch = []

    # NOTE: output kept f32 to match the reference; cast to bf16 here if the
    # downstream attention runs in bf16 (halves the writeback traffic).
    return pl.pallas_call(
        kernel,
        out_shape=jax.ShapeDtypeStruct((P, T, N), jnp.float32),
        grid_spec=pltpu.PrefetchScalarGridSpec(
            num_scalar_prefetch=0,
            grid=grid,
            in_specs=in_specs,
            out_specs=out_spec,
            scratch_shapes=scratch,
        ),
        compiler_params=pltpu.CompilerParams(
            dimension_semantics=("parallel", "parallel", "parallel",
                                 "arbitrary"),
            vmem_limit_bytes=_VMEM_LIMIT,
        ),
    )(x_q, w_q, scales, bias)


@functools.partial(jax.jit, static_argnames=("act_wl",))
def _quant_forward(x2d, w_q, w_scales, bias, *, act_wl):
    """Pre-quantize activations once (plain JAX), fold a_scale into the
    per-column weight scales, then run the fused Pallas projection."""
    a_qmax = 2.0 ** (act_wl - 1) - 1.0
    a_scale = jnp.maximum(jnp.max(jnp.abs(x2d)) / a_qmax, _EPS)
    x_q = jnp.clip(jnp.round(x2d * (1.0 / a_scale)), -a_qmax, a_qmax)
    x_q = x_q.astype(jnp.int8)
    scales = (a_scale * w_scales).astype(jnp.float32)       # [3, 1, D_out]
    return _qkv_pallas(x_q, w_q, scales, bias)


# ---------------------------------------------------------------------------
# Wrapper: JAX analogue of QuantWrapper (forward delegates to the wrapped
# attention q/k/v projections, now fused + fake-quantized).
# ---------------------------------------------------------------------------
class QuantWrapperJax:

    def __init__(self, params, quant_scheme):
        # TODO(synk): replace_with_quantized's named_children traversal /
        # module surgery has no Pallas equivalent; the q/k/v QuantLinears are
        # materialized directly as fused pre-quantized parameters here.
        self._raw_params = params
        self.quant_scheme = quant_scheme
        self._prepare()

    def apply_quant_scheme(self, quant_scheme, filter=None):
        # TODO(synk): named_modules filter traversal has no Pallas equivalent;
        # the scheme applies to the single fused q/k/v projection.
        self.quant_scheme = quant_scheme
        self._prepare()

    def _prepare(self):
        """Pre-quantize frozen weights once: int8 integer-valued weights,
        pre-transposed & stacked [3, D_in, D_out], per-column scales."""
        act_wl, weight_wl = self.quant_scheme
        assert act_wl <= 8 and weight_wl <= 8, (
            "int8 operand storage is only exact for word lengths <= 8 bits")
        w_qmax = 2.0 ** (weight_wl - 1) - 1.0
        w_ints, scales, biases, d_outs = [], [], [], []
        for p in ("q", "k", "v"):
            w = self._raw_params["w" + p].astype(jnp.float32)   # [D_out, D_in]
            s = jnp.maximum(jnp.max(jnp.abs(w)) / w_qmax, _EPS)
            w_int = jnp.clip(jnp.round(w / s), -w_qmax, w_qmax)
            w_ints.append(w_int.T.astype(jnp.int8))              # [D_in, D_out]
            scales.append(jnp.full((1, w.shape[0]), s, jnp.float32))
            biases.append(
                self._raw_params["b" + p].astype(jnp.float32).reshape(1, -1))
            d_outs.append(w.shape[0])
        assert d_outs[0] == d_outs[1] == d_outs[2], (
            "fused (3, T, D_out) output layout requires equal q/k/v widths")
        self.d_out = d_outs[0]
        self.w_q = jnp.stack(w_ints)            # [3, D_in, D_out] int8
        self.w_scales = jnp.stack(scales)       # [3, 1, D_out]    f32
        self.bias = jnp.stack(biases)           # [3, 1, D_out]    f32

    def __call__(self, x):
        # x: [B, S, D] -> (q, k, v) each [B, S, D_out]
        B, S, D = x.shape
        act_wl, _ = self.quant_scheme
        xt = x.reshape(B * S, D).astype(jnp.float32)
        out = _quant_forward(xt, self.w_q, self.w_scales, self.bias,
                             act_wl=act_wl)                     # [3, T, D_out]
        q = out[0].reshape(B, S, self.d_out)
        k = out[1].reshape(B, S, self.d_out)
        v = out[2].reshape(B, S, self.d_out)
        return q, k, v

    # TODO(synk): loss_acc depends on the full wrapped network; not part of the
    # quantized-projection hot path implemented here.


# ---------------------------------------------------------------------------
# Pure-JAX reference (mirrors the PyTorch QuantLinear semantics).
# ---------------------------------------------------------------------------
def _reference(x, params, act_wl, weight_wl):
    def fq(t, wl):
        qmax = 2.0 ** (wl - 1) - 1.0
        s = jnp.maximum(jnp.max(jnp.abs(t)) / qmax, _EPS)
        return jnp.clip(jnp.round(t / s), -qmax, qmax) * s

    B, S, D = x.shape
    xt = fq(x.reshape(B * S, D).astype(jnp.float32), act_wl)
    outs = []
    for p in ("q", "k", "v"):
        w = fq(params["w" + p].astype(jnp.float32), weight_wl)
        outs.append((xt @ w.T + params["b" + p]).reshape(B, S, -1))
    return tuple(outs)


if __name__ == "__main__":
    key = jax.random.PRNGKey(0)
    kx, kq, kk, kv, kbq, kbk, kbv = jax.random.split(key, 7)

    # Small but lane-dense shapes: hidden = 128 so all blocks satisfy the
    # (8, 128) layout without masked partial stores.
    B, S, D = 2, 16, 128
    x = jax.random.normal(kx, (B, S, D), dtype=jnp.float32)

    params = {
        "wq": jax.random.normal(kq, (D, D), dtype=jnp.float32) * 0.1,
        "wk": jax.random.normal(kk, (D, D), dtype=jnp.float32) * 0.1,
        "wv": jax.random.normal(kv, (D, D), dtype=jnp.float32) * 0.1,
        "bq": jax.random.normal(kbq, (D,), dtype=jnp.float32) * 0.01,
        "bk": jax.random.normal(kbk, (D,), dtype=jnp.float32) * 0.01,
        "bv": jax.random.normal(kbv, (D,), dtype=jnp.float32) * 0.01,
    }

    model = QuantWrapperJax(params, quant_scheme=(ACT_WL, WEIGHT_WL))
    out = model(x)
    out = jax.block_until_ready(out)

    ref = _reference(x, params, ACT_WL, WEIGHT_WL)
    for o, r in zip(out, ref):
        assert o.shape == r.shape, (o.shape, r.shape)
        err = jnp.max(jnp.abs(o - r))
        assert err < 1e-4, err

    print("KERNEL_OK")
</pallas_src>

<mosaic_0001>
module attributes {stable_mosaic.version = 11 : i64} {
  func.func @_qkv_kernel_bf16(%arg0: i32, %arg1: i32, %arg2: i32, %arg3: i32, %arg4: memref<32x128xi8, #tpu.memory_space<vmem>>, %arg5: memref<1x128x128xi8, #tpu.memory_space<vmem>>, %arg6: memref<1x1x128xf32, #tpu.memory_space<vmem>>, %arg7: memref<1x1x128xf32, #tpu.memory_space<vmem>>, %arg8: memref<1x32x128xf32, #tpu.memory_space<vmem>>) attributes {dimension_semantics = [#tpu.dimension_semantics<parallel>, #tpu.dimension_semantics<parallel>, #tpu.dimension_semantics<parallel>, #tpu.dimension_semantics<arbitrary>], iteration_bounds = array<i64: 3, 1, 1, 1>, scalar_prefetch = 0 : i64, scratch_operands = 0 : i64, tpu.core_type = #tpu.core_type<tc>, window_params = [{transform_indices = @transform_0, window_bounds = array<i64: 32, 128>}, {transform_indices = @transform_1, window_bounds = array<i64: 1, 128, 128>}, {transform_indices = @transform_2, window_bounds = array<i64: 1, 1, 128>}, {transform_indices = @transform_3, window_bounds = array<i64: 1, 1, 128>}, {transform_indices = @transform_4, window_bounds = array<i64: 1, 32, 128>}]} {
    %c0_i32 = arith.constant 0 : i32
    %0 = arith.cmpi eq, %arg3, %c0_i32 : i32
    %1 = arith.extui %0 : i1 to i32
    %c0_i32_0 = arith.constant 0 : i32
    %2 = arith.cmpi ne, %1, %c0_i32_0 : i32
    scf.if %2 {
      %cst_13 = arith.constant 0.000000e+00 : f32
      %20 = vector.broadcast %cst_13 : f32 to vector<32x128xf32>
      %c0_14 = arith.constant 0 : index
      %c0_15 = arith.constant 0 : index
      %c0_16 = arith.constant 0 : index
      %21 = vector.load %arg8[%c0_14, %c0_15, %c0_16] : memref<1x32x128xf32, #tpu.memory_space<vmem>>, vector<1x32x128xf32>
      %22 = vector.shape_cast %21 : vector<1x32x128xf32> to vector<32x128xf32>
      %23 = vector.shape_cast %20 : vector<32x128xf32> to vector<1x32x128xf32>
      tpu.vector_store %arg8[%c0_14, %c0_15, %c0_16], %23 {strides = array<i32>} : memref<1x32x128xf32, #tpu.memory_space<vmem>>, vector<1x32x128xf32>,
    } else {
    }
    %c0 = arith.constant 0 : index
    %c0_1 = arith.constant 0 : index
    %3 = vector.load %arg4[%c0, %c0_1] : memref<32x128xi8, #tpu.memory_space<vmem>>, vector<32x128xi8>
    %4 = arith.sitofp %3 : vector<32x128xi8> to vector<32x128xf32>
    %5 = arith.truncf %4 : vector<32x128xf32> to vector<32x128xbf16>
    %c0_2 = arith.constant 0 : index
    %c0_3 = arith.constant 0 : index
    %c0_4 = arith.constant 0 : index
    %6 = vector.load %arg5[%c0_2, %c0_3, %c0_4] : memref<1x128x128xi8, #tpu.memory_space<vmem>>, vector<1x128x128xi8>
    %7 = vector.shape_cast %6 : vector<1x128x128xi8> to vector<128x128xi8>
    %8 = arith.sitofp %7 : vector<128x128xi8> to vector<128x128xf32>
    %9 = arith.truncf %8 : vector<128x128xf32> to vector<128x128xbf16>
    %c0_5 = arith.constant 0 : index
    %c0_6 = arith.constant 0 : index
    %c0_7 = arith.constant 0 : index
    %10 = vector.load %arg8[%c0_5, %c0_6, %c0_7] : memref<1x32x128xf32, #tpu.memory_space<vmem>>, vector<1x32x128xf32>
    %11 = vector.shape_cast %10 : vector<1x32x128xf32> to vector<32x128xf32>
    %cst = arith.constant dense<0.000000e+00> : vector<32x128xf32>
    %12 = tpu.matmul %5, %9, %cst {dimension_numbers = #tpu.dot_dimension_numbers<[1], [0], [0], [1], [0, 0, 1, 1], [], []>} : vector<32x128xbf16>, vector<128x128xbf16>, vector<32x128xf32> -> vector<32x128xf32>
    %13 = arith.addf %11, %12 : vector<32x128xf32>
    %c0_8 = arith.constant 0 : index
    %c0_9 = arith.constant 0 : index
    %c0_10 = arith.constant 0 : index
    %14 = vector.load %arg8[%c0_8, %c0_9, %c0_10] : memref<1x32x128xf32, #tpu.memory_space<vmem>>, vector<1x32x128xf32>
    %15 = vector.shape_cast %14 : vector<1x32x128xf32> to vector<32x128xf32>
    %16 = vector.shape_cast %13 : vector<32x128xf32> to vector<1x32x128xf32>
    tpu.vector_store %arg8[%c0_8, %c0_9, %c0_10], %16 {strides = array<i32>} : memref<1x32x128xf32, #tpu.memory_space<vmem>>, vector<1x32x128xf32>,
    %c0_i32_11 = arith.constant 0 : i32
    %17 = arith.cmpi eq, %arg3, %c0_i32_11 : i32
    %18 = arith.extui %17 : i1 to i32
    %c0_i32_12 = arith.constant 0 : i32
    %19 = arith.cmpi ne, %18, %c0_i32_12 : i32
    scf.if %19 {
      %c0_13 = arith.constant 0 : index
      %c0_14 = arith.constant 0 : index
      %c0_15 = arith.constant 0 : index
      %20 = vector.load %arg8[%c0_13, %c0_14, %c0_15] : memref<1x32x128xf32, #tpu.memory_space<vmem>>, vector<1x32x128xf32>
      %21 = vector.shape_cast %20 : vector<1x32x128xf32> to vector<32x128xf32>
      %c0_16 = arith.constant 0 : index
      %c0_17 = arith.constant 0 : index
      %c0_18 = arith.constant 0 : index
      %22 = vector.load %arg6[%c0_16, %c0_17, %c0_18] : memref<1x1x128xf32, #tpu.memory_space<vmem>>, vector<1x1x128xf32>
      %23 = vector.shape_cast %22 : vector<1x1x128xf32> to vector<1x128xf32>
      %24 = vector.broadcast %23 : vector<1x128xf32> to vector<32x128xf32>
      %25 = arith.mulf %21, %24 : vector<32x128xf32>
      %c0_19 = arith.constant 0 : index
      %c0_20 = arith.constant 0 : index
      %c0_21 = arith.constant 0 : index
      %26 = vector.load %arg7[%c0_19, %c0_20, %c0_21] : memref<1x1x128xf32, #tpu.memory_space<vmem>>, vector<1x1x128xf32>
      %27 = vector.shape_cast %26 : vector<1x1x128xf32> to vector<1x128xf32>
      %28 = vector.broadcast %27 : vector<1x128xf32> to vector<32x128xf32>
      %29 = arith.addf %25, %28 : vector<32x128xf32>
      %c0_22 = arith.constant 0 : index
      %c0_23 = arith.constant 0 : index
      %c0_24 = arith.constant 0 : index
      %30 = vector.load %arg8[%c0_22, %c0_23, %c0_24] : memref<1x32x128xf32, #tpu.memory_space<vmem>>, vector<1x32x128xf32>
      %31 = vector.shape_cast %30 : vector<1x32x128xf32> to vector<32x128xf32>
      %32 = vector.shape_cast %29 : vector<32x128xf32> to vector<1x32x128xf32>
      tpu.vector_store %arg8[%c0_22, %c0_23, %c0_24], %32 {strides = array<i32>} : memref<1x32x128xf32, #tpu.memory_space<vmem>>, vector<1x32x128xf32>,
    } else {
    }
    return
  }
  func.func @transform_0(%arg0: i32, %arg1: i32, %arg2: i32, %arg3: i32) -> (i32, i32) {
    %c0_i32 = arith.constant 0 : i32
    return %arg1, %arg3 : i32, i32
  }
  func.func @transform_1(%arg0: i32, %arg1: i32, %arg2: i32, %arg3: i32) -> (i32, i32, i32) {
    %c0_i32 = arith.constant 0 : i32
    return %arg0, %arg3, %arg2 : i32, i32, i32
  }
  func.func @transform_2(%arg0: i32, %arg1: i32, %arg2: i32, %arg3: i32) -> (i32, i32, i32) {
    %c0_i32 = arith.constant 0 : i32
    %c0_i32_0 = arith.constant 0 : i32
    return %arg0, %c0_i32, %arg2 : i32, i32, i32
  }
  func.func @transform_3(%arg0: i32, %arg1: i32, %arg2: i32, %arg3: i32) -> (i32, i32, i32) {
    %c0_i32 = arith.constant 0 : i32
    %c0_i32_0 = arith.constant 0 : i32
    return %arg0, %c0_i32, %arg2 : i32, i32, i32
  }
  func.func @transform_4(%arg0: i32, %arg1: i32, %arg2: i32, %arg3: i32) -> (i32, i32, i32) {
    %c0_i32 = arith.constant 0 : i32
    return %arg0, %arg1, %arg2 : i32, i32, i32
  }
}

</mosaic_0001>

<llo_original>
// kernel: _quant_forward.1
$region0: #{_quant_forward.1}
  #allocation0 [shape = 'u32[]', space=smem, size = 0x4, offset = 0x4, fixed_abs, tag = 'smem constant byte address 0x4 - core index']
  #allocation1 [shape = 'u32[144,128]{1,0:T(1,128)}', space=vmem, size = 0x12000, scoped, tag = 'internal scratch']
  %s0 = inlined_call_operand.vmem [shape: s8[32,128], index: 0, kind: input, shape index: {}]
  %s1 = inlined_call_operand.hbm [shape: s8[3,128,128], index: 1, kind: input, shape index: {}]
  %s2 = inlined_call_operand.vmem [shape: f32[3,1,128], index: 2, kind: input, shape index: {}]
  %s3 = inlined_call_operand.vmem [shape: f32[3,1,128], index: 3, kind: input, shape index: {}]
  %s4 = inlined_call_operand.hbm [shape: f32[3,32,128], index: 4, kind: output, shape index: {}]
  %s5 = sld [smem:[#allocation0]]
  $region61: #{_quant_forward.1} parent=0
    _
  %s7 = ssub.s32 1, %s5
  %s8 = scalar_select 0, %s7, %s5
  $region1: #{_quant_forward.1} parent=0
    #allocation2 [shape = 'u8[32768]{0}', space=vmem, size = 0x8000, scoped, tag = 'input window, operand 1']
    #allocation3 [shape = 's32[2]{0}', space=sflag, size = 0x8, scoped, tag = 'scoped memory for _quant_forward.1']
    #allocation4 [shape = 's32[2]{0}', space=sflag, size = 0x8, scoped, tag = 'scoped memory for _quant_forward.1']
    #allocation5 [shape = 'u8[32768]{0}', space=vmem, size = 0x8000, scoped, tag = 'output window, operand 0']
    %9 = vsyncpa [#allocation3], 0
    %s10 = scalar_lea.sflag [#allocation3], 1
    %11 = vsyncpa %s10, 0
    %12 = vsyncpa [#allocation4], 0
    %s13 = scalar_lea.sflag [#allocation4], 1
    %14 = vsyncpa %s13, 0
    loop: start=0, step=1, limit=5
    $region2: #{_quant_forward.1} parent=1 // loop_pre_header
      _
    $region3: #{_quant_forward.1} parent=1 // loop_header
      %s16 = sphi 0, %s20
      %p17 = scmp.ge.s32.totalorder %s16, 5
      %s23 = sphi 0, %s49
      %s24 = sphi 0, %s45
      %s25 = sphi 0, %s41
      %s26 = sphi 0, %s37
      %s27 = sphi 0, %s23
      %s28 = sphi 0, %s24
      %s29 = sphi 0, %s25
      %s30 = sphi 0, %s26
      %s31 = sphi 0, %s27
      %s32 = sphi 0, %s28
      %s33 = sphi 0, %s29
      %s34 = sphi 0, %s30
      %s54 = sphi 0, %s56
      %s57 = sphi 0, %s54
      %s58 = sphi 0, %s57
      %s74 = sphi 0, %s58
      %s84 = sphi 0, %s86
      %s87 = sphi 0, %s84
      %s88 = sphi 0, %s87
      %s104 = sphi 0, %s88
      %s112 = sphi 0, %s114
      %s115 = sphi 0, %s112
      %s116 = sphi 0, %s115
      %s132 = sphi 0, %s116
      %s140 = sphi 0, %s142
      %s143 = sphi 0, %s140
      %s144 = sphi 0, %s143
      %s160 = sphi 0, %s144
      %s170 = sphi 0, %s172
      %s173 = sphi 0, %s170
      %s174 = sphi 0, %s173
      %s190 = sphi 0, %s174
    $region4: #{_quant_forward.1} parent=1 // loop_header_branch
      %19 = sbr.rel (%p17) target = $region8
    $region5: #{_quant_forward.1} parent=1 // loop_body
      %s21 = ssub.s32 %s16, 1
      %s22 = ssub.s32 %s16, 2
      %s35 = sadd.s32 1, %s26
      %p36 = scmp.ge.s32.totalorder %s35, 1
      %s37 = scalar_select %p36, 0, %s35
      %s38 = sadd.s32 1, %s25
      %s39 = scalar_select %p36, %s38, %s25
      %p40 = scmp.ge.s32.totalorder %s39, 1
      %s41 = scalar_select %p40, 0, %s39
      %s42 = sadd.s32 1, %s24
      %s43 = scalar_select %p40, %s42, %s24
      %p44 = scmp.ge.s32.totalorder %s43, 1
      %s45 = scalar_select %p44, 0, %s43
      %s46 = sadd.s32 1, %s23
      %s47 = scalar_select %p44, %s46, %s23
      %p48 = scmp.ge.s32.totalorder %s47, 3
      %s49 = scalar_select %p48, 0, %s47
      %s50 = ssub.s32 %s24, %s45
      %s51 = ssub.s32 %s26, %s37
      %s52 = sor.u32 %s50, %s51
      %p53 = scmp.eq.s32.totalorder %s52, 0
      %s55 = sadd.s32 %s54, 1
      %s56 = scalar_select %p53, %s54, %s55
      %p59 = pneg %p53
      %p60 = scmp.eq.s32.totalorder %s16, 2
      %p61 = por %p59, %p60
      %p62 = scmp.ne.s32.totalorder %s54, %s57
      %p63 = scmp.eq.s32.totalorder %s16, 0
      %p64 = por %p62, %p63
      %p65 = scmp.ne.s32.totalorder %s54, %s57
      %p66 = scmp.eq.s32.totalorder %s21, 2
      %p67 = por %p65, %p66
      %p68 = scmp.ne.s32.totalorder %s57, %s58
      %p69 = scmp.eq.s32.totalorder %s21, 0
      %p70 = por %p68, %p69
      %p71 = scmp.ne.s32.totalorder %s57, %s58
      %p72 = scmp.eq.s32.totalorder %s22, 2
      %p73 = por %p71, %p72
      %p75 = scmp.ne.s32.totalorder %s58, %s74
      %p76 = scmp.eq.s32.totalorder %s22, 0
      %p77 = por %p75, %p76
      %s78 = ssub.s32 %s23, %s49
      %s79 = ssub.s32 %s26, %s37
      %s80 = sor.u32 %s78, %s79
      %s81 = ssub.s32 %s25, %s41
      %s82 = sor.u32 %s80, %s81
      %p83 = scmp.eq.s32.totalorder %s82, 0
      %s85 = sadd.s32 %s84, 1
      %s86 = scalar_select %p83, %s84, %s85
      %p89 = pneg %p83
      %p90 = scmp.eq.s32.totalorder %s16, 2
      %p91 = por %p89, %p90
      %p92 = scmp.ne.s32.totalorder %s84, %s87
      %p93 = scmp.eq.s32.totalorder %s16, 0
      %p94 = por %p92, %p93
      %p95 = scmp.ne.s32.totalorder %s84, %s87
      %p96 = scmp.eq.s32.totalorder %s21, 2
      %p97 = por %p95, %p96
      %p98 = scmp.ne.s32.totalorder %s87, %s88
      %p99 = scmp.eq.s32.totalorder %s21, 0
      %p100 = por %p98, %p99
      %p101 = scmp.ne.s32.totalorder %s87, %s88
      %p102 = scmp.eq.s32.totalorder %s22, 2
      %p103 = por %p101, %p102
      %p105 = scmp.ne.s32.totalorder %s88, %s104
      %p106 = scmp.eq.s32.totalorder %s22, 0
      %p107 = por %p105, %p106
      %s108 = ssub.s32 %s23, %s49
      %s109 = ssub.s32 %s25, %s41
      %s110 = sor.u32 %s108, %s109
      %p111 = scmp.eq.s32.totalorder %s110, 0
      %s113 = sadd.s32 %s112, 1
      %s114 = scalar_select %p111, %s112, %s113
      %p117 = pneg %p111
      %p118 = scmp.eq.s32.totalorder %s16, 2
      %p119 = por %p117, %p118
      %p120 = scmp.ne.s32.totalorder %s112, %s115
      %p121 = scmp.eq.s32.totalorder %s16, 0
      %p122 = por %p120, %p121
      %p123 = scmp.ne.s32.totalorder %s112, %s115
      %p124 = scmp.eq.s32.totalorder %s21, 2
      %p125 = por %p123, %p124
      %p126 = scmp.ne.s32.totalorder %s115, %s116
      %p127 = scmp.eq.s32.totalorder %s21, 0
      %p128 = por %p126, %p127
      %p129 = scmp.ne.s32.totalorder %s115, %s116
      %p130 = scmp.eq.s32.totalorder %s22, 2
      %p131 = por %p129, %p130
      %p133 = scmp.ne.s32.totalorder %s116, %s132
      %p134 = scmp.eq.s32.totalorder %s22, 0
      %p135 = por %p133, %p134
      %s136 = ssub.s32 %s23, %s49
      %s137 = ssub.s32 %s25, %s41
      %s138 = sor.u32 %s136, %s137
      %p139 = scmp.eq.s32.totalorder %s138, 0
      %s141 = sadd.s32 %s140, 1
      %s142 = scalar_select %p139, %s140, %s141
      %p145 = pneg %p139
      %p146 = scmp.eq.s32.totalorder %s16, 2
      %p147 = por %p145, %p146
      %p148 = scmp.ne.s32.totalorder %s140, %s143
      %p149 = scmp.eq.s32.totalorder %s16, 0
      %p150 = por %p148, %p149
      %p151 = scmp.ne.s32.totalorder %s140, %s143
      %p152 = scmp.eq.s32.totalorder %s21, 2
      %p153 = por %p151, %p152
      %p154 = scmp.ne.s32.totalorder %s143, %s144
      %p155 = scmp.eq.s32.totalorder %s21, 0
      %p156 = por %p154, %p155
      %p157 = scmp.ne.s32.totalorder %s143, %s144
      %p158 = scmp.eq.s32.totalorder %s22, 2
      %p159 = por %p157, %p158
      %p161 = scmp.ne.s32.totalorder %s144, %s160
      %p162 = scmp.eq.s32.totalorder %s22, 0
      %p163 = por %p161, %p162
      %s164 = ssub.s32 %s23, %s49
      %s165 = ssub.s32 %s24, %s45
      %s166 = sor.u32 %s164, %s165
      %s167 = ssub.s32 %s25, %s41
      %s168 = sor.u32 %s166, %s167
      %p169 = scmp.eq.s32.totalorder %s168, 0
      %s171 = sadd.s32 %s170, 1
      %s172 = scalar_select %p169, %s170, %s171
      %p175 = pneg %p169
      %p176 = scmp.eq.s32.totalorder %s16, 2
      %p177 = por %p175, %p176
      %p178 = scmp.ne.s32.totalorder %s170, %s173
      %p179 = scmp.eq.s32.totalorder %s16, 0
      %p180 = por %p178, %p179
      %p181 = scmp.ne.s32.totalorder %s170, %s173
      %p182 = scmp.eq.s32.totalorder %s21, 2
      %p183 = por %p181, %p182
      %p184 = scmp.ne.s32.totalorder %s173, %s174
      %p185 = scmp.eq.s32.totalorder %s21, 0
      %p186 = por %p184, %p185
      %p187 = scmp.ne.s32.totalorder %s173, %s174
      %p188 = scmp.eq.s32.totalorder %s22, 2
      %p189 = por %p187, %p188
      %p191 = scmp.ne.s32.totalorder %s174, %s190
      %p192 = scmp.eq.s32.totalorder %s22, 0
      %p193 = por %p191, %p192
      %p194 = scmp.le.s32.totalorder 1, %s16
      %p195 = scmp.lt.s32.totalorder %s16, 4
      %p196 = pnand %p194, %p195
      %p197 = pneg %p196
      // Predicated region
      $region9: #{_quant_forward.1} parent=5 // pred_check
        _
      $region10: #{_quant_forward.1} parent=5 // pred_check_branch
        %199 = sbr.rel (%p196) target = $region12
      $region11: #{_quant_forward.1} parent=5 // pred_region
        %s200 = ssub.s32 %s16, 1
        // Predicated region
        $region13: #{_quant_forward.1} parent=11 // pred_check
          %p201 = pneg %p70
        $region14: #{_quant_forward.1} parent=11 // pred_check_branch
          %203 = sbr.rel (%p201) target = $region16
        $region15: #{_quant_forward.1} parent=11 // pred_region
          %p204 = scmp.lt.s32.totalorder %s28, 0
          %s205 = scalar_select %p204, %s28, 0
          %p206 = scmp.lt.s32.totalorder %s30, 0
          %s207 = scalar_select %p206, %s30, 0
          %s208 = sadd.s32 %s207, %s205
          %s209 = smul.addr %s208, 8
          %s210 = scalar_lea.vmem %s0, %s209
        $region16: #{_quant_forward.1} parent=11 // pred_fallthru
          _
      $region12: #{_quant_forward.1} parent=5 // pred_fallthru
        _
      %p211 = scmp.lt.s32.totalorder %s16, 3
      // Predicated region
      $region17: #{_quant_forward.1} parent=5 // pred_check
        %p212 = pneg %p211
      $region18: #{_quant_forward.1} parent=5 // pred_check_branch
        %214 = sbr.rel (%p212) target = $region20
      $region19: #{_quant_forward.1} parent=5 // pred_region
        // Predicated region
        $region21: #{_quant_forward.1} parent=19 // pred_check
          %p215 = pneg %p94
        $region22: #{_quant_forward.1} parent=19 // pred_check_branch
          %217 = sbr.rel (%p215) target = $region24
        $region23: #{_quant_forward.1} parent=19 // pred_region
          %s218 = sand.u32 %s84, 1
          %s219 = scalar_lea.sflag [#allocation3], %s218
          %s220 = sand.u32 %s84, 1
          %s221 = smul.addr %s220, 32
          %s222 = scalar_lea.vmem [#allocation2], %s221
          %s223 = smul.u32 4, %s26
          %s225 = ssub.s32 512, 512
          %226 = vsyncadd %s219, %s225
          %s227 = sadd.s32 %s25, %s223
          %s228 = smul.addr %s23, 4
          %s229 = sadd.s32 %s227, %s228
          %s230 = smul.addr %s229, 128
          %s231 = scalar_lea.hbm %s1, %s230
          %s232 = sshll.u32 %s222, 4
          %s233 = int_to_ptr.vmem [resolvable:$true] %s232
          %238 = dma.hbm_to_vmem [thread:$0]  %s231, 512, %s233, %s219, 128, 128, 8
        $region24: #{_quant_forward.1} parent=19 // pred_fallthru
          _
        // Predicated region
        $region25: #{_quant_forward.1} parent=19 // pred_check
          %p239 = pneg %p122
        $region26: #{_quant_forward.1} parent=19 // pred_check_branch
          %241 = sbr.rel (%p239) target = $region28
        $region27: #{_quant_forward.1} parent=19 // pred_region
          %p242 = scmp.lt.s32.totalorder %s23, 2
          %s243 = scalar_select %p242, %s23, 2
          %p244 = scmp.lt.s32.totalorder %s25, 0
          %s245 = scalar_select %p244, %s25, 0
          %s246 = sadd.s32 %s245, %s243
          %s247 = scalar_lea.vmem %s2, %s246
        $region28: #{_quant_forward.1} parent=19 // pred_fallthru
          _
        // Predicated region
        $region29: #{_quant_forward.1} parent=19 // pred_check
          %p248 = pneg %p150
        $region30: #{_quant_forward.1} parent=19 // pred_check_branch
          %250 = sbr.rel (%p248) target = $region32
        $region31: #{_quant_forward.1} parent=19 // pred_region
          %p251 = scmp.lt.s32.totalorder %s23, 2
          %s252 = scalar_select %p251, %s23, 2
          %p253 = scmp.lt.s32.totalorder %s25, 0
          %s254 = scalar_select %p253, %s25, 0
          %s255 = sadd.s32 %s254, %s252
          %s256 = scalar_lea.vmem %s3, %s255
        $region32: #{_quant_forward.1} parent=19 // pred_fallthru
          _
      $region20: #{_quant_forward.1} parent=5 // pred_fallthru
        _
      %p257 = scmp.le.s32.totalorder 1, %s16
      %p258 = scmp.lt.s32.totalorder %s16, 4
      %p259 = pnand %p257, %p258
      %p260 = pneg %p259
      // Predicated region
      $region33: #{_quant_forward.1} parent=5 // pred_check
        _
      $region34: #{_quant_forward.1} parent=5 // pred_check_branch
        %262 = sbr.rel (%p259) target = $region36
      $region35: #{_quant_forward.1} parent=5 // pred_region
        %s263 = ssub.s32 %s16, 1
        %s264 = sand.u32 %s87, 1
        %s265 = scalar_lea.sflag [#allocation3], %s264
        %s266 = sand.u32 %s87, 1
        %s267 = smul.addr %s266, 32
        %s268 = scalar_lea.vmem [#allocation2], %s267
        // Predicated region
        $region37: #{_quant_forward.1} parent=35 // pred_check
          %p269 = pneg %p100
        $region38: #{_quant_forward.1} parent=35 // pred_check_branch
          %271 = sbr.rel (%p269) target = $region40
        $region39: #{_quant_forward.1} parent=35 // pred_region
          %272 = dma.done %s265, 512
        $region40: #{_quant_forward.1} parent=35 // pred_fallthru
          _
        %p273 = scmp.lt.s32.totalorder %s28, 0
        %s274 = scalar_select %p273, %s28, 0
        %p275 = scmp.lt.s32.totalorder %s30, 0
        %s276 = scalar_select %p275, %s30, 0
        %s277 = sadd.s32 %s276, %s274
        %s278 = smul.addr %s277, 8
        %s279 = scalar_lea.vmem %s0, %s278
        %p280 = pneg %p70
        %p281 = pneg %p67
        %s282 = sand.u32 %s87, 1
        %s283 = scalar_lea.sflag [#allocation3], %s282
        %s284 = sand.u32 %s87, 1
        %s285 = smul.addr %s284, 32
        %s286 = scalar_lea.vmem [#allocation2], %s285
        %p287 = pneg %p100
        %p288 = pneg %p97
        %p289 = scmp.lt.s32.totalorder %s27, 2
        %s290 = scalar_select %p289, %s27, 2
        %p291 = scmp.lt.s32.totalorder %s29, 0
        %s292 = scalar_select %p291, %s29, 0
        %s293 = sadd.s32 %s292, %s290
        %s294 = scalar_lea.vmem %s2, %s293
        %p295 = pneg %p128
        %p296 = pneg %p125
        %p297 = scmp.lt.s32.totalorder %s27, 2
        %s298 = scalar_select %p297, %s27, 2
        %p299 = scmp.lt.s32.totalorder %s29, 0
        %s300 = scalar_select %p299, %s29, 0
        %s301 = sadd.s32 %s300, %s298
        %s302 = scalar_lea.vmem %s3, %s301
        %p303 = pneg %p156
        %p304 = pneg %p153
        %p305 = pneg %p186
        %p306 = pneg %p183
        %s307 = sand.u32 %s173, 1
        %s308 = scalar_lea.sflag [#allocation4], %s307
        %s309 = sand.u32 %s173, 1
        %s310 = smul.addr %s309, 32
        %s311 = scalar_lea.vmem [#allocation5], %s310
        %p312 = scmp.lt.s32.totalorder %s28, 0
        %s313 = scalar_select %p312, %s28, 0
        %p314 = scmp.lt.s32.totalorder %s30, 0
        %s315 = scalar_select %p314, %s30, 0
        %s316 = sadd.s32 %s315, %s313
        %s317 = smul.addr %s316, 8
        %s318 = scalar_lea.vmem %s0, %s317
        %s319 = smul.u32 4, %s30
        %p320 = scmp.lt.s32.totalorder %s27, 2
        %s321 = scalar_select %p320, %s27, 2
        %p322 = scmp.lt.s32.totalorder %s29, 0
        %s323 = scalar_select %p322, %s29, 0
        %s324 = sadd.s32 %s323, %s321
        %s325 = scalar_lea.vmem %s2, %s324
        %p326 = scmp.lt.s32.totalorder %s27, 2
        %s327 = scalar_select %p326, %s27, 2
        %p328 = scmp.lt.s32.totalorder %s29, 0
        %s329 = scalar_select %p328, %s29, 0
        %s330 = sadd.s32 %s329, %s327
        %s331 = scalar_lea.vmem %s3, %s330
        %s332 = smul.u32 4, %s28
        %p334 = scmp.eq.s32.totalorder %s30, 0
        // Predicated region
        $region41: #{_quant_forward.1} parent=35 // pred_check
          %p335 = pneg %p334
        $region42: #{_quant_forward.1} parent=35 // pred_check_branch
          %337 = sbr.rel (%p335) target = $region44
        $region43: #{_quant_forward.1} parent=35 // pred_region
          %338 = vst [vmem:[%s311] sm:$0xff] 0.0
          %339 = vst [vmem:[%s311 + $0x8] sm:$0xff] 0.0
          %340 = vst [vmem:[%s311 + $0x10] sm:$0xff] 0.0
          %341 = vst [vmem:[%s311 + $0x18] sm:$0xff] 0.0
        $region44: #{_quant_forward.1} parent=35 // pred_fallthru
          _
        %v342 = vld [vmem:[%s318] sm:$0xff]
        %v343 = vunpack.c.l.s8.bf16 %v342
        %v344 = vunpack.c.h.s8.bf16 %v342
        %v345 = vld [vmem:[%s268] sm:$0xff]
        %v346 = vld [vmem:[%s268 + $0x8] sm:$0xff]
        %v347 = vld [vmem:[%s268 + $0x10] sm:$0xff]
        %v348 = vld [vmem:[%s268 + $0x18] sm:$0xff]
        %v349 = vunpack.c.l.s8.bf16 %v345
        %v350 = vunpack.c.h.s8.bf16 %v345
        %v351 = vunpack.c.l.s8.bf16 %v346
        %v352 = vunpack.c.h.s8.bf16 %v346
        %v353 = vunpack.c.l.s8.bf16 %v347
        %v354 = vunpack.c.h.s8.bf16 %v347
        %v355 = vunpack.c.l.s8.bf16 %v348
        %v356 = vunpack.c.h.s8.bf16 %v348
        %v357 = vld [vmem:[%s311] sm:$0xff]
        %v358 = vld [vmem:[%s311 + $0x8] sm:$0xff]
        %v359 = vld [vmem:[%s311 + $0x10] sm:$0xff]
        %v360 = vld [vmem:[%s311 + $0x18] sm:$0xff]
        %361 = vmatprep.subr.bf16.mxu0 0
        %362 = vmatpush1.bf16.msra.mxu0 %v349
        %363 = vmatprep.subr.bf16.mxu0 0
        %364 = vmatpush1.bf16.msra.mxu0 %v350
        %365 = vmatprep.subr.bf16.mxu0 0
        %366 = vmatpush1.bf16.msra.mxu0 %v351
        %367 = vmatprep.subr.bf16.mxu0 0
        %368 = vmatpush1.bf16.msra.mxu0 %v352
        %369 = vmatprep.subr.bf16.mxu0 0
        %370 = vmatpush1.bf16.msra.mxu0 %v353
        %371 = vmatprep.subr.bf16.mxu0 0
        %372 = vmatpush1.bf16.msra.mxu0 %v354
        %373 = vmatprep.subr.bf16.mxu0 0
        %374 = vmatpush1.bf16.msra.mxu0 %v355
        %375 = vmatprep.subr.bf16.mxu0 0
        %376 = vmatpush1.bf16.msra.mxu0 %v356
        %377 = vmatprep.subr.bf16.mxu0 0
        %378 = vmatpush1.bf16.msra.mxu0 0
        %379 = vmatprep.subr.bf16.mxu0 0
        %380 = vmatpush1.bf16.msra.mxu0 0
        %381 = vmatprep.subr.bf16.mxu0 0
        %382 = vmatpush1.bf16.msra.mxu0 0
        %383 = vmatprep.subr.bf16.mxu0 0
        %384 = vmatpush1.bf16.msra.mxu0 0
        %385 = vmatprep.subr.bf16.mxu0 0
        %386 = vmatpush1.bf16.msra.mxu0 0
        %387 = vmatprep.subr.bf16.mxu0 0
        %388 = vmatpush1.bf16.msra.mxu0 0
        %389 = vmatprep.subr.bf16.mxu0 0
        %390 = vmatpush1.bf16.msra.mxu0 0
        %391 = vmatprep.subr.bf16.mxu0 0
        %392 = vmatpush1.bf16.msra.mxu0 0
        %393 = vmatprep.mubr.bf16.mxu0 0
        %394 = vmatmul.mubr.bf16.gmra.mrb[0].mxu0 %v343
        %v395 = vpop.f32.mrb[0].mxu0
        %v396 = vadd.f32 0.0, %v395
        %v397 = vpop.f32.mrb[0].mxu0
        %v398 = vpop.f32.mrb[0].mxu0
        %v399 = vadd.f32 0.0, %v398
        %v400 = vpop.f32.mrb[0].mxu0
        %401 = vmatprep.mubr.bf16.mxu0 0
        %402 = vmatmul.mubr.bf16.gmra.mrb[0].mxu0 %v344
        %v403 = vpop.f32.mrb[0].mxu0
        %v404 = vadd.f32 0.0, %v403
        %v405 = vpop.f32.mrb[0].mxu0
        %v406 = vpop.f32.mrb[0].mxu0
        %v407 = vadd.f32 0.0, %v406
        %v408 = vpop.f32.mrb[0].mxu0
        %409 = vdwg.mxu0
        %v410 = vadd.f32 %v357, %v396
        %v411 = vadd.f32 %v358, %v399
        %v412 = vadd.f32 %v359, %v404
        %v413 = vadd.f32 %v360, %v407
        %414 = vst [vmem:[%s311] sm:$0xff] %v410
        %415 = vst [vmem:[%s311 + $0x8] sm:$0xff] %v411
        %416 = vst [vmem:[%s311 + $0x10] sm:$0xff] %v412
        %417 = vst [vmem:[%s311 + $0x18] sm:$0xff] %v413
        // Predicated region
        $region45: #{_quant_forward.1} parent=35 // pred_check
          %p418 = pneg %p334
        $region46: #{_quant_forward.1} parent=35 // pred_check_branch
          %420 = sbr.rel (%p418) target = $region48
        $region47: #{_quant_forward.1} parent=35 // pred_region
          %v421 = vld [vmem:[%s311] sm:$0xff]
          %v422 = vld [vmem:[%s311 + $0x8] sm:$0xff]
          %v423 = vld [vmem:[%s311 + $0x10] sm:$0xff]
          %v424 = vld [vmem:[%s311 + $0x18] sm:$0xff]
          %v425 = vld [vmem:[%s325] sm:$0x1]
          %v427 = vlaneseq
          %v428 = vshrl.u32 %v427, 7
          %v429 = vsub.s32 0, %v428
          %v430 = vrot.slane %v425, %v429
          %v432 = vmul.f32 %v421, %v430
          %v433 = vmul.f32 %v422, %v430
          %v434 = vmul.f32 %v423, %v430
          %v435 = vmul.f32 %v424, %v430
          %v436 = vld [vmem:[%s331] sm:$0x1]
          %v438 = vlaneseq
          %v439 = vshrl.u32 %v438, 7
          %v440 = vsub.s32 0, %v439
          %v441 = vrot.slane %v436, %v440
          %v443 = vadd.f32 %v432, %v441
          %v444 = vadd.f32 %v433, %v441
          %v445 = vadd.f32 %v434, %v441
          %v446 = vadd.f32 %v435, %v441
          %447 = vst [vmem:[%s311] sm:$0xff] %v443
          %448 = vst [vmem:[%s311 + $0x8] sm:$0xff] %v444
          %449 = vst [vmem:[%s311 + $0x10] sm:$0xff] %v445
          %450 = vst [vmem:[%s311 + $0x18] sm:$0xff] %v446
        $region48: #{_quant_forward.1} parent=35 // pred_fallthru
          _
        %s451 = sand.u32 %s173, 1
        %s452 = scalar_lea.sflag [#allocation4], %s451
        %s453 = sand.u32 %s173, 1
        %s454 = smul.addr %s453, 32
        %s455 = scalar_lea.vmem [#allocation5], %s454
        // Predicated region
        $region49: #{_quant_forward.1} parent=35 // pred_check
          %p456 = pneg %p183
        $region50: #{_quant_forward.1} parent=35 // pred_check_branch
          %458 = sbr.rel (%p456) target = $region52
        $region51: #{_quant_forward.1} parent=35 // pred_region
          %s459 = smul.u32 4, %s28
          %s461 = ssub.s32 512, 512
          %462 = vsyncadd %s452, %s461
          %s463 = sadd.s32 %s29, %s459
          %s464 = smul.addr %s27, 4
          %s465 = sadd.s32 %s463, %s464
          %s466 = smul.addr %s465, 128
          %s467 = scalar_lea.hbm %s4, %s466
          %s468 = sshll.u32 %s455, 4
          %s469 = int_to_ptr.vmem [resolvable:$true] %s468
          %474 = dma.vmem_to_hbm [thread:$0]  %s469, 512, %s467, %s452, 128, 128, 8
        $region52: #{_quant_forward.1} parent=35 // pred_fallthru
          _
      $region36: #{_quant_forward.1} parent=5 // pred_fallthru
        _
      %p475 = scmp.le.s32.totalorder 2, %s16
      // Predicated region
      $region53: #{_quant_forward.1} parent=5 // pred_check
        %p476 = pneg %p475
      $region54: #{_quant_forward.1} parent=5 // pred_check_branch
        %478 = sbr.rel (%p476) target = $region56
      $region55: #{_quant_forward.1} parent=5 // pred_region
        %s479 = ssub.s32 %s16, 2
        // Predicated region
        $region57: #{_quant_forward.1} parent=55 // pred_check
          %p480 = pneg %p189
        $region58: #{_quant_forward.1} parent=55 // pred_check_branch
          %482 = sbr.rel (%p480) target = $region60
        $region59: #{_quant_forward.1} parent=55 // pred_region
          %s483 = sand.u32 %s174, 1
          %s484 = scalar_lea.sflag [#allocation4], %s483
          %s485 = sand.u32 %s174, 1
          %s486 = smul.addr %s485, 32
          %s487 = scalar_lea.vmem [#allocation5], %s486
          %488 = dma.done %s484, 512
        $region60: #{_quant_forward.1} parent=55 // pred_fallthru
          _
      $region56: #{_quant_forward.1} parent=5 // pred_fallthru
        _
    $region6: #{_quant_forward.1} parent=1 // loop_footer
      %s20 = sadd.s32 1, %s16
    $region7: #{_quant_forward.1} parent=1 // loop_footer_branch
      %15 = sbr.rel target = $region3
    $region8: #{_quant_forward.1} parent=1 // loop_exit
      _
    %489 = vsyncpa [#allocation3], 1
    %s490 = scalar_lea.sflag [#allocation3], 1
    %491 = vsyncpa %s490, 1
    %492 = vsyncpa [#allocation4], 1
    %s493 = scalar_lea.sflag [#allocation4], 1
    %494 = vsyncpa %s493, 1

</llo_original>
